<compile_context>
chip_gen: v7x
topology: tpu7x:2x2x1
jax: 0.10.0
libtpu: 0.0.40
codegen_flags: <defaults>
</compile_context>

<pallas_src>
import functools

import jax
import jax.numpy as jnp
from jax import lax
from jax.experimental import pallas as pl
from jax.experimental.pallas import tpu as pltpu

LANES = 128


def _mse_kernel(x_ref, t_ref, o_ref, acc_ref, *, total_rows, tile_rows,
                inv_n, needs_mask):
    # x_ref, t_ref: (tile_rows, 128) VMEM tiles (native dtype)
    # o_ref:        (1, 1) SMEM scalar output
    # acc_ref:      (tile_rows, 128) f32 VMEM accumulator (carried over grid)
    step = pl.program_id(0)

    @pl.when(step == 0)
    def _():
        acc_ref[...] = jnp.zeros_like(acc_ref)

    d = x_ref[...].astype(jnp.float32) - t_ref[...].astype(jnp.float32)
    sq = d * d

    if needs_mask:
        # Only the last grid step can over-cover rows; per-row compare
        # broadcast over lanes is cheap VPU filler under the HBM-bound regime.
        row_ids = step * tile_rows + lax.broadcasted_iota(
            jnp.int32, (tile_rows, 1), 0)
        sq = jnp.where(row_ids < total_rows, sq, 0.0)

    # Pure-VPU vector accumulate; no per-step XLU reduce or scalar store.
    acc_ref[...] += sq

    @pl.when(step == pl.num_programs(0) - 1)
    def _():
        o_ref[0, 0] = jnp.sum(acc_ref[...]) * inv_n


@functools.partial(jax.jit, static_argnames=("tile_rows",))
def mse_loss_pallas(x, target, *, tile_rows=2048):
    assert x.shape == target.shape, "mse_loss requires matching shapes"
    n = x.size
    assert n > 0

    xf = jnp.ravel(x)
    tf = jnp.ravel(target)

    rows = pl.cdiv(n, LANES)
    pad = rows * LANES - n
    if pad:  # only a <128-element tail; zero pad is sum-neutral
        xf = jnp.pad(xf, (0, pad))
        tf = jnp.pad(tf, (0, pad))
    xf = xf.reshape(rows, LANES)
    tf = tf.reshape(rows, LANES)

    # Cap tile at the 8-aligned row count so small inputs don't allocate
    # oversized VMEM buffers; tile stays a multiple of 8 sublanes.
    tile_rows = min(tile_rows, pl.cdiv(rows, 8) * 8)
    num_blocks = pl.cdiv(rows, tile_rows)
    needs_mask = (rows % tile_rows) != 0

    kernel = functools.partial(
        _mse_kernel,
        total_rows=rows,
        tile_rows=tile_rows,
        inv_n=1.0 / n,
        needs_mask=needs_mask,
    )

    out = pl.pallas_call(
        kernel,
        out_shape=jax.ShapeDtypeStruct((1, 1), jnp.float32),
        grid_spec=pltpu.PrefetchScalarGridSpec(
            num_scalar_prefetch=0,
            grid=(num_blocks,),
            in_specs=[
                pl.BlockSpec((tile_rows, LANES), lambda i: (i, 0)),
                pl.BlockSpec((tile_rows, LANES), lambda i: (i, 0)),
            ],
            out_specs=pl.BlockSpec(
                (1, 1), lambda i: (0, 0), memory_space=pltpu.SMEM),
            scratch_shapes=[pltpu.VMEM((tile_rows, LANES), jnp.float32)],
        ),
        compiler_params=pltpu.CompilerParams(
            dimension_semantics=("arbitrary",)),
    )(xf, tf)

    return out[0, 0]


if __name__ == "__main__":
    key = jax.random.PRNGKey(0)
    kx, kt = jax.random.split(key)
    # Small shapes consistent with the module's forward (elementwise MSE).
    x = jax.random.normal(kx, (2, 4, 16, 16), dtype=jnp.float32)
    target = jax.random.normal(kt, (2, 4, 16, 16), dtype=jnp.float32)

    loss = mse_loss_pallas(x, target)
    jax.block_until_ready(loss)

    # Sanity check against plain-JAX reference.
    ref = jnp.mean((x - target) ** 2)
    assert jnp.allclose(loss, ref, rtol=1e-5, atol=1e-6), (loss, ref)

    print("KERNEL_OK")
</pallas_src>

<mosaic_0001>
module attributes {stable_mosaic.version = 11 : i64} {
  func.func @_mse_kernel(%arg0: i32, %arg1: memref<16x128xf32, #tpu.memory_space<vmem>>, %arg2: memref<16x128xf32, #tpu.memory_space<vmem>>, %arg3: memref<1x1xf32, #tpu.memory_space<smem>>, %arg4: memref<16x128xf32, #tpu.memory_space<vmem>>) attributes {dimension_semantics = [#tpu.dimension_semantics<arbitrary>], iteration_bounds = array<i64: 1>, scalar_prefetch = 0 : i64, scratch_operands = 1 : i64, tpu.core_type = #tpu.core_type<tc>, window_params = [{transform_indices = @transform_0, window_bounds = array<i64: 16, 128>}, {transform_indices = @transform_1, window_bounds = array<i64: 16, 128>}, {transform_indices = @transform_2, window_bounds = array<i64: 1, 1>}]} {
    %c0_i32 = arith.constant 0 : i32
    %0 = arith.cmpi eq, %arg0, %c0_i32 : i32
    %1 = arith.extui %0 : i1 to i32
    %c0_i32_0 = arith.constant 0 : i32
    %2 = arith.cmpi ne, %1, %c0_i32_0 : i32
    scf.if %2 {
      %cst = arith.constant 0.000000e+00 : f32
      %13 = vector.broadcast %cst : f32 to vector<16x128xf32>
      %c0_10 = arith.constant 0 : index
      %c0_11 = arith.constant 0 : index
      %14 = vector.load %arg4[%c0_10, %c0_11] : memref<16x128xf32, #tpu.memory_space<vmem>>, vector<16x128xf32>
      tpu.vector_store %arg4[%c0_10, %c0_11], %13 {strides = array<i32>} : memref<16x128xf32, #tpu.memory_space<vmem>>, vector<16x128xf32>,
    } else {
    }
    %c0 = arith.constant 0 : index
    %c0_1 = arith.constant 0 : index
    %3 = vector.load %arg1[%c0, %c0_1] : memref<16x128xf32, #tpu.memory_space<vmem>>, vector<16x128xf32>
    %c0_2 = arith.constant 0 : index
    %c0_3 = arith.constant 0 : index
    %4 = vector.load %arg2[%c0_2, %c0_3] : memref<16x128xf32, #tpu.memory_space<vmem>>, vector<16x128xf32>
    %5 = arith.subf %3, %4 : vector<16x128xf32>
    %6 = arith.mulf %5, %5 : vector<16x128xf32>
    %c0_4 = arith.constant 0 : index
    %c0_5 = arith.constant 0 : index
    %7 = vector.load %arg4[%c0_4, %c0_5] : memref<16x128xf32, #tpu.memory_space<vmem>>, vector<16x128xf32>
    %8 = arith.addf %7, %6 : vector<16x128xf32>
    %c0_6 = arith.constant 0 : index
    %c0_7 = arith.constant 0 : index
    %9 = vector.load %arg4[%c0_6, %c0_7] : memref<16x128xf32, #tpu.memory_space<vmem>>, vector<16x128xf32>
    tpu.vector_store %arg4[%c0_6, %c0_7], %8 {strides = array<i32>} : memref<16x128xf32, #tpu.memory_space<vmem>>, vector<16x128xf32>,
    %c0_i32_8 = arith.constant 0 : i32
    %10 = arith.cmpi eq, %arg0, %c0_i32_8 : i32
    %11 = arith.extui %10 : i1 to i32
    %c0_i32_9 = arith.constant 0 : i32
    %12 = arith.cmpi ne, %11, %c0_i32_9 : i32
    scf.if %12 {
      %c0_10 = arith.constant 0 : index
      %c0_11 = arith.constant 0 : index
      %13 = vector.load %arg4[%c0_10, %c0_11] : memref<16x128xf32, #tpu.memory_space<vmem>>, vector<16x128xf32>
      %14 = vector.shape_cast %13 : vector<16x128xf32> to vector<1x16x128xf32>
      %cst = arith.constant dense<0.000000e+00> : vector<1xf32>
      %15 = vector.multi_reduction <add>, %14, %cst [1, 2] : vector<1x16x128xf32> to vector<1xf32>
      %16 = vector.shape_cast %15 : vector<1xf32> to vector<1x1x1xf32>
      %17 = vector.extract %16[0, 0, 0] : f32 from vector<1x1x1xf32>
      %cst_12 = arith.constant 4.8828125E-4 : f32
      %18 = arith.mulf %17, %cst_12 : f32
      %c0_13 = arith.constant 0 : index
      %c0_14 = arith.constant 0 : index
      %19 = memref.load %arg3[%c0_13, %c0_14] : memref<1x1xf32, #tpu.memory_space<smem>>
      memref.store %18, %arg3[%c0_13, %c0_14] : memref<1x1xf32, #tpu.memory_space<smem>>
    } else {
    }
    return
  }
  func.func @transform_0(%arg0: i32) -> (i32, i32) {
    %c0_i32 = arith.constant 0 : i32
    %c0_i32_0 = arith.constant 0 : i32
    return %arg0, %c0_i32 : i32, i32
  }
  func.func @transform_1(%arg0: i32) -> (i32, i32) {
    %c0_i32 = arith.constant 0 : i32
    %c0_i32_0 = arith.constant 0 : i32
    return %arg0, %c0_i32 : i32, i32
  }
  func.func @transform_2(%arg0: i32) -> (i32, i32) {
    %c0_i32 = arith.constant 0 : i32
    %c0_i32_0 = arith.constant 0 : i32
    %c0_i32_1 = arith.constant 0 : i32
    return %c0_i32, %c0_i32_0 : i32, i32
  }
}

</mosaic_0001>

<llo_original>
// kernel: mse_loss_pallas.1
$region0: #{mse_loss_pallas.1}
  #allocation0 [shape = 'u32[]', space=smem, size = 0x4, offset = 0x4, fixed_abs, tag = 'smem constant byte address 0x4 - core index']
  #allocation1 [shape = 'u32[144,128]{1,0:T(1,128)}', space=vmem, size = 0x12000, scoped, tag = 'internal scratch']
  #allocation2 [shape = 'f32[16,128]{1,0:T(8,128)}', space=vmem, size = 0x2000, scoped, tag = 'scratch operand']
  %s0 = inlined_call_operand.vmem [shape: f32[16,128], index: 0, kind: input, shape index: {}]
  %s1 = inlined_call_operand.vmem [shape: f32[16,128], index: 1, kind: input, shape index: {}]
  %s2 = inlined_call_operand.hbm [shape: f32[1,1], index: 2, kind: output, shape index: {}]
  %s3 = sld [smem:[#allocation0]]
  $region26: #{mse_loss_pallas.1} parent=0
    _
  %s5 = ssub.s32 1, %s3
  %s6 = scalar_select 0, %s5, %s3
  $region1: #{mse_loss_pallas.1} parent=0
    #allocation3 [shape = 'u8[512]{0}', space=smem, size = 0x200, scoped, tag = 'output window, operand 0, single buffered']
    #allocation4 [shape = 's32[1]{0}', space=sflag, size = 0x4, scoped, tag = 'scoped memory for mse_loss_pallas.1']
    %7 = vsyncpa [#allocation4], 0
    // Predicated region
    $region2: #{mse_loss_pallas.1} parent=1 // pred_check
      _
    $region3: #{mse_loss_pallas.1} parent=1 // pred_check_branch
      %9 = sbr.rel (0) target = $region5
    $region4: #{mse_loss_pallas.1} parent=1 // pred_region
      _
    $region5: #{mse_loss_pallas.1} parent=1 // pred_fallthru
      _
    // Predicated region
    $region6: #{mse_loss_pallas.1} parent=1 // pred_check
      _
    $region7: #{mse_loss_pallas.1} parent=1 // pred_check_branch
      %11 = sbr.rel (0) target = $region9
    $region8: #{mse_loss_pallas.1} parent=1 // pred_region
      _
    $region9: #{mse_loss_pallas.1} parent=1 // pred_fallthru
      _
    %p12 = scmp.eq.s32.totalorder 0, 0
    // Predicated region
    $region10: #{mse_loss_pallas.1} parent=1 // pred_check
      %p13 = pneg %p12
    $region11: #{mse_loss_pallas.1} parent=1 // pred_check_branch
      %15 = sbr.rel (%p13) target = $region13
    $region12: #{mse_loss_pallas.1} parent=1 // pred_region
      %16 = vst [vmem:[#allocation2] sm:$0xff] 0.0
      %17 = vst [vmem:[#allocation2 + $0x8] sm:$0xff] 0.0
    $region13: #{mse_loss_pallas.1} parent=1 // pred_fallthru
      _
    %v18 = vld [vmem:[%s0] sm:$0xff]
    %v19 = vld [vmem:[%s0 + $0x8] sm:$0xff]
    %v20 = vld [vmem:[%s1] sm:$0xff]
    %v21 = vld [vmem:[%s1 + $0x8] sm:$0xff]
    %v22 = vsub.f32 %v18, %v20
    %v23 = vsub.f32 %v19, %v21
    %v24 = vmul.f32 %v22, %v22
    %v25 = vmul.f32 %v23, %v23
    %v26 = vld [vmem:[#allocation2] sm:$0xff]
    %v27 = vld [vmem:[#allocation2 + $0x8] sm:$0xff]
    %v28 = vadd.f32 %v26, %v24
    %v29 = vadd.f32 %v27, %v25
    %30 = vst [vmem:[#allocation2] sm:$0xff] %v28
    %31 = vst [vmem:[#allocation2 + $0x8] sm:$0xff] %v29
    // Predicated region
    $region14: #{mse_loss_pallas.1} parent=1 // pred_check
      %p32 = pneg %p12
    $region15: #{mse_loss_pallas.1} parent=1 // pred_check_branch
      %34 = sbr.rel (%p32) target = $region17
    $region16: #{mse_loss_pallas.1} parent=1 // pred_region
      %v35 = vld [vmem:[#allocation2] sm:$0xff]
      %v36 = vld [vmem:[#allocation2 + $0x8] sm:$0xff]
      %v37 = vadd.f32 %v35, %v36
      %38 = vadd.xlane.f32.xlu0 %v37
      %v39 = vpop.xlane.xlu0 %38
      %v40 = vrot.slane %v39, 4
      %v41 = vadd.f32 %v39, %v40
      %v42 = vrot.slane %v41, 2
      %v43 = vadd.f32 %v41, %v42
      %v44 = vrot.slane %v43, 1
      %v45 = vadd.f32 %v43, %v44
      %s46 = vtos %v45
      %s47 = smul.f32 %s46, 0.00048828125
      %s48 = scalar_lea.smem [#allocation3], 0
      %49 = sst [smem:[%s48]] %s47
    $region17: #{mse_loss_pallas.1} parent=1 // pred_fallthru
      _
    // Predicated region
    $region18: #{mse_loss_pallas.1} parent=1 // pred_check
      _
    $region19: #{mse_loss_pallas.1} parent=1 // pred_check_branch
      %51 = sbr.rel (0) target = $region21
    $region20: #{mse_loss_pallas.1} parent=1 // pred_region
      %s53 = ssub.s32 16, 16
      %54 = vsyncadd [#allocation4], %s53
      %57 = dma.smem_to_hbm [#allocation3], 16, %s2, [#allocation4]
    $region21: #{mse_loss_pallas.1} parent=1 // pred_fallthru
      _
    // Predicated region
    $region22: #{mse_loss_pallas.1} parent=1 // pred_check
      _
    $region23: #{mse_loss_pallas.1} parent=1 // pred_check_branch
      %59 = sbr.rel (0) target = $region25
    $region24: #{mse_loss_pallas.1} parent=1 // pred_region
      %60 = dma.done [#allocation4], 16
    $region25: #{mse_loss_pallas.1} parent=1 // pred_fallthru
      _
    %61 = sfence
    %62 = vsyncpa [#allocation4], 1

</llo_original>
